<compile_context>
chip_gen: v6e
topology: v6e:2x2x1
jax: 0.10.0
libtpu: 0.0.40
codegen_flags: <defaults>
</compile_context>

<pallas_src>
import functools

import jax
import jax.numpy as jnp
from jax.experimental import pallas as pl
from jax.experimental.pallas import tpu as pltpu

LANE = 128


def _round_up(x, m):
    return ((x + m - 1) // m) * m


# ---------------------------------------------------------------------------
# Fused 3-layer GraphSAGE kernel (mean aggregator), whole problem in VMEM
# ---------------------------------------------------------------------------
def _encoder_kernel(a_ref, x_ref, w_ref, b_ref, o_ref, *, num_layers, f_pad):
    a = a_ref[...]                                   # (Np, Np) bf16
    h = x_ref[...]                                   # (Np, F)  bf16
    for li in range(num_layers):
        h_bf = h.astype(jnp.bfloat16)                # activations -> bf16 operands
        w_cat = w_ref[li]                            # (F, 2F) = [W_self | W_neigh], bf16
        # one MXU pass for both projections, f32 accumulation
        p = jnp.dot(h_bf, w_cat, preferred_element_type=jnp.float32)   # (Np, 2F)
        p_self = p[:, :f_pad]                        # 128-lane aligned slices
        p_neigh = p[:, f_pad:].astype(jnp.bfloat16)
        # re-associated neighbor term: A @ (H @ W_neigh), f32 accumulation
        h = (p_self
             + jnp.dot(a, p_neigh, preferred_element_type=jnp.float32)
             + b_ref[li])                            # (1, F) f32 bias broadcast
        if li < num_layers - 1:
            h = jnp.maximum(h, 0.0)                  # ReLU on the f32 accumulator
    o_ref[...] = h.astype(o_ref.dtype)


# ---------------------------------------------------------------------------
# One-time padding / stacking (hoisted out of the hot path)
# ---------------------------------------------------------------------------
def prepare_encoder_inputs(a_norm, x, params, compute_dtype=jnp.bfloat16):
    """Pad A/X to (Np, Fp) lane-dense tiles and stack per-layer [W_self|W_neigh].

    Padded rows/cols of A are zero so padded nodes never contribute to real
    rows; padded feature columns stay zero because the corresponding weight
    rows/cols and bias entries are zero.  (Bias+ReLU do make padded *rows*
    nonzero, which is harmless because real rows of A have zeros there and the
    output is sliced back to (n, out_dim).)
    """
    n, in_dim = x.shape
    num_layers = len(params)
    out_dim = params[-1][0].shape[1]

    dims = [in_dim] + [p[0].shape[1] for p in params]
    f_pad = _round_up(max(dims), LANE)            # one padded width for all layers
    n_pad = _round_up(n, LANE)                    # N is also a lane dim (cols of A)

    a_p = jnp.zeros((n_pad, n_pad), jnp.float32).at[:n, :n].set(a_norm)
    x_p = jnp.zeros((n_pad, f_pad), jnp.float32).at[:n, :in_dim].set(x)

    w_all, b_all = [], []
    for (w_self, w_neigh, bias) in params:
        fi, fo = w_self.shape
        ws_p = jnp.zeros((f_pad, f_pad), jnp.float32).at[:fi, :fo].set(w_self)
        wn_p = jnp.zeros((f_pad, f_pad), jnp.float32).at[:fi, :fo].set(w_neigh)
        w_all.append(jnp.concatenate([ws_p, wn_p], axis=1))            # (F, 2F)
        b_all.append(jnp.zeros((1, f_pad), jnp.float32).at[:, :fo].set(bias))

    w_all = jnp.stack(w_all).astype(compute_dtype)   # (L, F, 2F) bf16
    b_all = jnp.stack(b_all)                         # (L, 1, F)  f32 (epilogue)
    a_p = a_p.astype(compute_dtype)
    x_p = x_p.astype(compute_dtype)
    return (a_p, x_p, w_all, b_all), (n, out_dim)


# ---------------------------------------------------------------------------
# Hot path: pallas_call on pre-padded inputs
# ---------------------------------------------------------------------------
@functools.partial(jax.jit, static_argnames=("n", "out_dim"))
def encoder_forward_padded(a_p, x_p, w_all, b_all, *, n, out_dim):
    n_pad = a_p.shape[0]
    f_pad = x_p.shape[1]
    num_layers = w_all.shape[0]

    flops = num_layers * (2 * n_pad * f_pad * (2 * f_pad)       # projections
                          + 2 * n_pad * n_pad * f_pad)          # A matmul
    raw_bytes = (a_p.size * a_p.dtype.itemsize
                 + x_p.size * x_p.dtype.itemsize
                 + w_all.size * w_all.dtype.itemsize
                 + b_all.size * b_all.dtype.itemsize
                 + n_pad * f_pad * 4)                           # f32 output
    # Actual footprint + headroom for compiler scratch/temps; cap well below
    # the v7x 64 MiB per-core physical VMEM.
    vmem_limit = int(min(max(4 * raw_bytes, 8 << 20), 48 << 20))

    kernel = functools.partial(_encoder_kernel,
                               num_layers=int(num_layers), f_pad=f_pad)
    out_p = pl.pallas_call(
        kernel,
        out_shape=jax.ShapeDtypeStruct((n_pad, f_pad), jnp.float32),
        # No grid: one invocation, whole arrays resident in VMEM (no pointless
        # double buffering for a single step).
        in_specs=[
            pl.BlockSpec(memory_space=pltpu.MemorySpace.VMEM),   # A  (bf16)
            pl.BlockSpec(memory_space=pltpu.MemorySpace.VMEM),   # X  (bf16)
            pl.BlockSpec(memory_space=pltpu.MemorySpace.VMEM),   # W  (bf16)
            pl.BlockSpec(memory_space=pltpu.MemorySpace.VMEM),   # b  (f32)
        ],
        out_specs=pl.BlockSpec(memory_space=pltpu.MemorySpace.VMEM),
        compiler_params=pltpu.CompilerParams(vmem_limit_bytes=vmem_limit),
        cost_estimate=pl.CostEstimate(flops=flops, transcendentals=0,
                                      bytes_accessed=raw_bytes),
    )(a_p, x_p, w_all, b_all)

    return out_p[:n, :out_dim]


def encoder_forward(a_norm, x, params):
    """Convenience one-shot equivalent of Encoder.forward(g, x)."""
    padded, (n, out_dim) = prepare_encoder_inputs(a_norm, x, params)
    return encoder_forward_padded(*padded, n=n, out_dim=out_dim)


# ---------------------------------------------------------------------------
# Parameter init + graph construction helpers
# ---------------------------------------------------------------------------
def init_encoder_params(key, in_dim, hidden_dim, out_dim):
    dims = [(in_dim, hidden_dim), (hidden_dim, hidden_dim), (hidden_dim, out_dim)]
    params = []
    for (fi, fo) in dims:
        key, k1, k2, k3 = jax.random.split(key, 4)
        scale = 1.0 / jnp.sqrt(jnp.float32(fi))
        w_self = jax.random.uniform(k1, (fi, fo), jnp.float32, -scale, scale)
        w_neigh = jax.random.uniform(k2, (fi, fo), jnp.float32, -scale, scale)
        bias = jax.random.uniform(k3, (1, fo), jnp.float32, -0.1, 0.1)
        params.append((w_self, w_neigh, bias))
    return params


def build_ring_graph(n):
    """Deterministic small graph: ring with neighbors i-1 and i+1 (mod n)."""
    idx = jnp.arange(n)
    adj = jnp.zeros((n, n), jnp.float32)
    adj = adj.at[idx, (idx + 1) % n].set(1.0)
    adj = adj.at[idx, (idx - 1) % n].set(1.0)
    deg = jnp.maximum(adj.sum(axis=1, keepdims=True), 1.0)
    return adj / deg  # row-normalized -> mean aggregation


if __name__ == "__main__":
    # Module-consistent small shapes: N nodes, in_dim=8, graph_hidden_dim=32,
    # out_dim=16 (padded internally to 128 lanes).
    N, IN_DIM, HIDDEN_DIM, OUT_DIM = 16, 8, 32, 16

    key = jax.random.PRNGKey(0)
    key, kx = jax.random.split(key)
    x = jax.random.normal(kx, (N, IN_DIM), jnp.float32)
    a_norm = build_ring_graph(N)
    params = init_encoder_params(key, IN_DIM, HIDDEN_DIM, OUT_DIM)

    # One-time padding (hoisted out of the hot path), then the fused kernel.
    padded, (n, out_dim) = prepare_encoder_inputs(a_norm, x, params)
    padded = jax.block_until_ready(padded)
    out = encoder_forward_padded(*padded, n=n, out_dim=out_dim)
    out = jax.block_until_ready(out)

    # Pure-JAX f32 reference (same math, no Pallas, no padding).
    h_ref = x
    for li, (ws, wn, b) in enumerate(params):
        hn = a_norm @ h_ref
        h_ref = h_ref @ ws + hn @ wn + b
        if li < len(params) - 1:
            h_ref = jnp.maximum(h_ref, 0.0)

    assert out.shape == (N, OUT_DIM)
    # Tolerance relaxed vs the f32 reference because matmul operands are bf16
    # (f32 accumulation); observed error is ~1e-2 absolute at these magnitudes.
    assert jnp.allclose(out, h_ref, atol=5e-2, rtol=5e-2), (
        float(jnp.max(jnp.abs(out - h_ref))))

    print("KERNEL_OK")
</pallas_src>

<mosaic_0001>
module attributes {stable_mosaic.version = 11 : i64} {
  func.func @_encoder_kernel(%arg0: memref<128x128xbf16, #tpu.memory_space<vmem>>, %arg1: memref<128x128xbf16, #tpu.memory_space<vmem>>, %arg2: memref<3x128x256xbf16, #tpu.memory_space<vmem>>, %arg3: memref<3x1x128xf32, #tpu.memory_space<vmem>>, %arg4: memref<128x128xf32, #tpu.memory_space<vmem>>) attributes {dimension_semantics = [], scalar_prefetch = 0 : i64, scratch_operands = 0 : i64, tpu.core_type = #tpu.core_type<tc>} {
    %c0 = arith.constant 0 : index
    %c0_0 = arith.constant 0 : index
    %0 = vector.load %arg0[%c0, %c0_0] : memref<128x128xbf16, #tpu.memory_space<vmem>>, vector<128x128xbf16>
    %c0_1 = arith.constant 0 : index
    %c0_2 = arith.constant 0 : index
    %1 = vector.load %arg1[%c0_1, %c0_2] : memref<128x128xbf16, #tpu.memory_space<vmem>>, vector<128x128xbf16>
    %c0_3 = arith.constant 0 : index
    %c0_4 = arith.constant 0 : index
    %c0_5 = arith.constant 0 : index
    %2 = vector.load %arg2[%c0_3, %c0_4, %c0_5] : memref<3x128x256xbf16, #tpu.memory_space<vmem>>, vector<1x128x256xbf16>
    %3 = vector.shape_cast %2 : vector<1x128x256xbf16> to vector<128x256xbf16>
    %cst = arith.constant dense<0.000000e+00> : vector<128x256xf32>
    %4 = tpu.matmul %1, %3, %cst {dimension_numbers = #tpu.dot_dimension_numbers<[1], [0], [0], [1], [0, 0, 1, 1], [], []>} : vector<128x128xbf16>, vector<128x256xbf16>, vector<128x256xf32> -> vector<128x256xf32>
    %5 = vector.extract_strided_slice %4 {offsets = [0, 0], sizes = [128, 128], strides = [1, 1]} : vector<128x256xf32> to vector<128x128xf32>
    %6 = vector.extract_strided_slice %4 {offsets = [0, 128], sizes = [128, 128], strides = [1, 1]} : vector<128x256xf32> to vector<128x128xf32>
    %7 = arith.truncf %6 : vector<128x128xf32> to vector<128x128xbf16>
    %cst_6 = arith.constant dense<0.000000e+00> : vector<128x128xf32>
    %8 = tpu.matmul %0, %7, %cst_6 {dimension_numbers = #tpu.dot_dimension_numbers<[1], [0], [0], [1], [0, 0, 1, 1], [], []>} : vector<128x128xbf16>, vector<128x128xbf16>, vector<128x128xf32> -> vector<128x128xf32>
    %9 = arith.addf %5, %8 : vector<128x128xf32>
    %c0_7 = arith.constant 0 : index
    %c0_8 = arith.constant 0 : index
    %c0_9 = arith.constant 0 : index
    %10 = vector.load %arg3[%c0_7, %c0_8, %c0_9] : memref<3x1x128xf32, #tpu.memory_space<vmem>>, vector<1x1x128xf32>
    %11 = vector.shape_cast %10 : vector<1x1x128xf32> to vector<1x128xf32>
    %12 = vector.broadcast %11 : vector<1x128xf32> to vector<128x128xf32>
    %13 = arith.addf %9, %12 : vector<128x128xf32>
    %cst_10 = arith.constant 0.000000e+00 : f32
    %14 = vector.broadcast %cst_10 : f32 to vector<128x128xf32>
    %15 = arith.maximumf %13, %14 : vector<128x128xf32>
    %16 = arith.truncf %15 : vector<128x128xf32> to vector<128x128xbf16>
    %c1 = arith.constant 1 : index
    %c0_11 = arith.constant 0 : index
    %c0_12 = arith.constant 0 : index
    %17 = vector.load %arg2[%c1, %c0_11, %c0_12] : memref<3x128x256xbf16, #tpu.memory_space<vmem>>, vector<1x128x256xbf16>
    %18 = vector.shape_cast %17 : vector<1x128x256xbf16> to vector<128x256xbf16>
    %cst_13 = arith.constant dense<0.000000e+00> : vector<128x256xf32>
    %19 = tpu.matmul %16, %18, %cst_13 {dimension_numbers = #tpu.dot_dimension_numbers<[1], [0], [0], [1], [0, 0, 1, 1], [], []>} : vector<128x128xbf16>, vector<128x256xbf16>, vector<128x256xf32> -> vector<128x256xf32>
    %20 = vector.extract_strided_slice %19 {offsets = [0, 0], sizes = [128, 128], strides = [1, 1]} : vector<128x256xf32> to vector<128x128xf32>
    %21 = vector.extract_strided_slice %19 {offsets = [0, 128], sizes = [128, 128], strides = [1, 1]} : vector<128x256xf32> to vector<128x128xf32>
    %22 = arith.truncf %21 : vector<128x128xf32> to vector<128x128xbf16>
    %cst_14 = arith.constant dense<0.000000e+00> : vector<128x128xf32>
    %23 = tpu.matmul %0, %22, %cst_14 {dimension_numbers = #tpu.dot_dimension_numbers<[1], [0], [0], [1], [0, 0, 1, 1], [], []>} : vector<128x128xbf16>, vector<128x128xbf16>, vector<128x128xf32> -> vector<128x128xf32>
    %24 = arith.addf %20, %23 : vector<128x128xf32>
    %c1_15 = arith.constant 1 : index
    %c0_16 = arith.constant 0 : index
    %c0_17 = arith.constant 0 : index
    %25 = vector.load %arg3[%c1_15, %c0_16, %c0_17] : memref<3x1x128xf32, #tpu.memory_space<vmem>>, vector<1x1x128xf32>
    %26 = vector.shape_cast %25 : vector<1x1x128xf32> to vector<1x128xf32>
    %27 = vector.broadcast %26 : vector<1x128xf32> to vector<128x128xf32>
    %28 = arith.addf %24, %27 : vector<128x128xf32>
    %cst_18 = arith.constant 0.000000e+00 : f32
    %29 = vector.broadcast %cst_18 : f32 to vector<128x128xf32>
    %30 = arith.maximumf %28, %29 : vector<128x128xf32>
    %31 = arith.truncf %30 : vector<128x128xf32> to vector<128x128xbf16>
    %c2 = arith.constant 2 : index
    %c0_19 = arith.constant 0 : index
    %c0_20 = arith.constant 0 : index
    %32 = vector.load %arg2[%c2, %c0_19, %c0_20] : memref<3x128x256xbf16, #tpu.memory_space<vmem>>, vector<1x128x256xbf16>
    %33 = vector.shape_cast %32 : vector<1x128x256xbf16> to vector<128x256xbf16>
    %cst_21 = arith.constant dense<0.000000e+00> : vector<128x256xf32>
    %34 = tpu.matmul %31, %33, %cst_21 {dimension_numbers = #tpu.dot_dimension_numbers<[1], [0], [0], [1], [0, 0, 1, 1], [], []>} : vector<128x128xbf16>, vector<128x256xbf16>, vector<128x256xf32> -> vector<128x256xf32>
    %35 = vector.extract_strided_slice %34 {offsets = [0, 0], sizes = [128, 128], strides = [1, 1]} : vector<128x256xf32> to vector<128x128xf32>
    %36 = vector.extract_strided_slice %34 {offsets = [0, 128], sizes = [128, 128], strides = [1, 1]} : vector<128x256xf32> to vector<128x128xf32>
    %37 = arith.truncf %36 : vector<128x128xf32> to vector<128x128xbf16>
    %cst_22 = arith.constant dense<0.000000e+00> : vector<128x128xf32>
    %38 = tpu.matmul %0, %37, %cst_22 {dimension_numbers = #tpu.dot_dimension_numbers<[1], [0], [0], [1], [0, 0, 1, 1], [], []>} : vector<128x128xbf16>, vector<128x128xbf16>, vector<128x128xf32> -> vector<128x128xf32>
    %39 = arith.addf %35, %38 : vector<128x128xf32>
    %c2_23 = arith.constant 2 : index
    %c0_24 = arith.constant 0 : index
    %c0_25 = arith.constant 0 : index
    %40 = vector.load %arg3[%c2_23, %c0_24, %c0_25] : memref<3x1x128xf32, #tpu.memory_space<vmem>>, vector<1x1x128xf32>
    %41 = vector.shape_cast %40 : vector<1x1x128xf32> to vector<1x128xf32>
    %42 = vector.broadcast %41 : vector<1x128xf32> to vector<128x128xf32>
    %43 = arith.addf %39, %42 : vector<128x128xf32>
    %c0_26 = arith.constant 0 : index
    %c0_27 = arith.constant 0 : index
    %44 = vector.load %arg4[%c0_26, %c0_27] : memref<128x128xf32, #tpu.memory_space<vmem>>, vector<128x128xf32>
    tpu.vector_store %arg4[%c0_26, %c0_27], %43 {strides = array<i32>} : memref<128x128xf32, #tpu.memory_space<vmem>>, vector<128x128xf32>,
    return
  }
}

</mosaic_0001>

<llo_original>
// kernel: encoder_forward_padded.1
$region0: #{encoder_forward_padded.1}
  #allocation0 [shape = 'u32[]', space=smem, size = 0x4, offset = 0x4, fixed_abs, tag = 'smem constant byte address 0x4 - core index']
  #allocation1 [shape = 'u32[144,128]{1,0:T(1,128)}', space=vmem, size = 0x12000, scoped, tag = 'internal scratch']
  %s0 = inlined_call_operand.hbm [shape: bf16[128,128], index: 0, kind: input, shape index: {}]
  %s1 = inlined_call_operand.hbm [shape: bf16[128,128], index: 1, kind: input, shape index: {}]
  %s2 = inlined_call_operand.hbm [shape: bf16[3,128,256], index: 2, kind: input, shape index: {}]
  %s3 = inlined_call_operand.vmem [shape: f32[3,1,128], index: 3, kind: input, shape index: {}]
  %s4 = inlined_call_operand.vmem [shape: f32[128,128], index: 4, kind: output, shape index: {}]
  %s5 = sld [smem:[#allocation0]]
  $region38: #{encoder_forward_padded.1} parent=0
    _
  %s7 = ssub.s32 1, %s5
  %s8 = scalar_select 0, %s7, %s5
  $region1: #{encoder_forward_padded.1} parent=0
    #allocation2 [shape = 'u8[32768]{0}', space=vmem, size = 0x8000, scoped, tag = 'input window, operand 0, single buffered']
    #allocation3 [shape = 's32[1]{0}', space=sflag, size = 0x4, scoped, tag = 'scoped memory for encoder_forward_padded.1']
    #allocation4 [shape = 'u8[32768]{0}', space=vmem, size = 0x8000, scoped, tag = 'input window, operand 1, single buffered']
    #allocation5 [shape = 's32[1]{0}', space=sflag, size = 0x4, scoped, tag = 'scoped memory for encoder_forward_padded.1']
    #allocation6 [shape = 'u8[196608]{0}', space=vmem, size = 0x30000, scoped, tag = 'input window, operand 2, single buffered']
    %9 = vsyncpa [#allocation3], 0
    %10 = vsyncpa [#allocation5], 0
    // Predicated region
    $region2: #{encoder_forward_padded.1} parent=1 // pred_check
      _
    $region3: #{encoder_forward_padded.1} parent=1 // pred_check_branch
      %12 = sbr.rel (0) target = $region5
    $region4: #{encoder_forward_padded.1} parent=1 // pred_region
      %s14 = ssub.s32 1024, 1024
      %15 = vsyncadd [#allocation3], %s14
      %s16 = sshll.u32 [#allocation2], 4
      %s17 = int_to_ptr.vmem [resolvable:$true] %s16
      %22 = dma.hbm_to_vmem [thread:$0]  %s0, 1024, %s17, [#allocation3], 64, 64, 4
    $region5: #{encoder_forward_padded.1} parent=1 // pred_fallthru
      _
    // Predicated region
    $region6: #{encoder_forward_padded.1} parent=1 // pred_check
      _
    $region7: #{encoder_forward_padded.1} parent=1 // pred_check_branch
      %24 = sbr.rel (0) target = $region9
    $region8: #{encoder_forward_padded.1} parent=1 // pred_region
      %s26 = ssub.s32 1024, 1024
      %27 = vsyncadd [#allocation5], %s26
      %s28 = sshll.u32 [#allocation4], 4
      %s29 = int_to_ptr.vmem [resolvable:$true] %s28
      %34 = dma.hbm_to_vmem [thread:$0]  %s1, 1024, %s29, [#allocation5], 64, 64, 4
    $region9: #{encoder_forward_padded.1} parent=1 // pred_fallthru
      _
    // Predicated region
    $region10: #{encoder_forward_padded.1} parent=1 // pred_check
      _
    $region11: #{encoder_forward_padded.1} parent=1 // pred_check_branch
      %36 = sbr.rel (0) target = $region13
    $region12: #{encoder_forward_padded.1} parent=1 // pred_region
      %s38 = ssub.s32 6144, 6144
      %39 = vsyncadd [#allocation5], %s38
      %s40 = sshll.u32 [#allocation6], 4
      %s41 = int_to_ptr.vmem [resolvable:$true] %s40
      %46 = dma.hbm_to_vmem [thread:$0]  %s2, 6144, %s41, [#allocation5], 128, 128, 8
    $region13: #{encoder_forward_padded.1} parent=1 // pred_fallthru
      _
    // Predicated region
    $region14: #{encoder_forward_padded.1} parent=1 // pred_check
      _
    $region15: #{encoder_forward_padded.1} parent=1 // pred_check_branch
      %48 = sbr.rel (0) target = $region17
    $region16: #{encoder_forward_padded.1} parent=1 // pred_region
      _
    $region17: #{encoder_forward_padded.1} parent=1 // pred_fallthru
      _
    // Predicated region
    $region18: #{encoder_forward_padded.1} parent=1 // pred_check
      _
    $region19: #{encoder_forward_padded.1} parent=1 // pred_check_branch
      %50 = sbr.rel (0) target = $region21
    $region20: #{encoder_forward_padded.1} parent=1 // pred_region
      %51 = dma.done [#allocation3], 1024
    $region21: #{encoder_forward_padded.1} parent=1 // pred_fallthru
      _
    // Predicated region
    $region22: #{encoder_forward_padded.1} parent=1 // pred_check
      _
    $region23: #{encoder_forward_padded.1} parent=1 // pred_check_branch
      %53 = sbr.rel (0) target = $region25
    $region24: #{encoder_forward_padded.1} parent=1 // pred_region
      %54 = dma.done [#allocation5], 1024
    $region25: #{encoder_forward_padded.1} parent=1 // pred_fallthru
      _
    // Predicated region
    $region26: #{encoder_forward_padded.1} parent=1 // pred_check
      _
    $region27: #{encoder_forward_padded.1} parent=1 // pred_check_branch
      %56 = sbr.rel (0) target = $region29
    $region28: #{encoder_forward_padded.1} parent=1 // pred_region
      %57 = dma.done [#allocation5], 6144
    $region29: #{encoder_forward_padded.1} parent=1 // pred_fallthru
      _
    %v59 = vld [vmem:[#allocation2] sm:$0xf]
    %v60 = vld [vmem:[#allocation2 + $0x4] sm:$0xf]
    %v61 = vld [vmem:[#allocation2 + $0x8] sm:$0xf]
    %v62 = vld [vmem:[#allocation2 + $0xc] sm:$0xf]
    %v63 = vld [vmem:[#allocation2 + $0x10] sm:$0xf]
    %v64 = vld [vmem:[#allocation2 + $0x14] sm:$0xf]
    %v65 = vld [vmem:[#allocation2 + $0x18] sm:$0xf]
    %v66 = vld [vmem:[#allocation2 + $0x1c] sm:$0xf]
    %v67 = vld [vmem:[#allocation2 + $0x20] sm:$0xf]
    %v68 = vld [vmem:[#allocation2 + $0x24] sm:$0xf]
    %v69 = vld [vmem:[#allocation2 + $0x28] sm:$0xf]
    %v70 = vld [vmem:[#allocation2 + $0x2c] sm:$0xf]
    %v71 = vld [vmem:[#allocation2 + $0x30] sm:$0xf]
    %v72 = vld [vmem:[#allocation2 + $0x34] sm:$0xf]
    %v73 = vld [vmem:[#allocation2 + $0x38] sm:$0xf]
    %v74 = vld [vmem:[#allocation2 + $0x3c] sm:$0xf]
    %v75 = vld [vmem:[#allocation4] sm:$0xf]
    %v76 = vld [vmem:[#allocation4 + $0x4] sm:$0xf]
    %v77 = vld [vmem:[#allocation4 + $0x8] sm:$0xf]
    %v78 = vld [vmem:[#allocation4 + $0xc] sm:$0xf]
    %v79 = vld [vmem:[#allocation4 + $0x10] sm:$0xf]
    %v80 = vld [vmem:[#allocation4 + $0x14] sm:$0xf]
    %v81 = vld [vmem:[#allocation4 + $0x18] sm:$0xf]
    %v82 = vld [vmem:[#allocation4 + $0x1c] sm:$0xf]
    %v83 = vld [vmem:[#allocation4 + $0x20] sm:$0xf]
    %v84 = vld [vmem:[#allocation4 + $0x24] sm:$0xf]
    %v85 = vld [vmem:[#allocation4 + $0x28] sm:$0xf]
    %v86 = vld [vmem:[#allocation4 + $0x2c] sm:$0xf]
    %v87 = vld [vmem:[#allocation4 + $0x30] sm:$0xf]
    %v88 = vld [vmem:[#allocation4 + $0x34] sm:$0xf]
    %v89 = vld [vmem:[#allocation4 + $0x38] sm:$0xf]
    %v90 = vld [vmem:[#allocation4 + $0x3c] sm:$0xf]
    %v91 = vld [vmem:[#allocation6] sm:$0xff]
    %v92 = vld [vmem:[#allocation6 + $0x8] sm:$0xff]
    %v93 = vld [vmem:[#allocation6 + $0x10] sm:$0xff]
    %v94 = vld [vmem:[#allocation6 + $0x18] sm:$0xff]
    %v95 = vld [vmem:[#allocation6 + $0x20] sm:$0xff]
    %v96 = vld [vmem:[#allocation6 + $0x28] sm:$0xff]
    %v97 = vld [vmem:[#allocation6 + $0x30] sm:$0xff]
    %v98 = vld [vmem:[#allocation6 + $0x38] sm:$0xff]
    %v99 = vld [vmem:[#allocation6 + $0x40] sm:$0xff]
    %v100 = vld [vmem:[#allocation6 + $0x48] sm:$0xff]
    %v101 = vld [vmem:[#allocation6 + $0x50] sm:$0xff]
    %v102 = vld [vmem:[#allocation6 + $0x58] sm:$0xff]
    %v103 = vld [vmem:[#allocation6 + $0x60] sm:$0xff]
    %v104 = vld [vmem:[#allocation6 + $0x68] sm:$0xff]
    %v105 = vld [vmem:[#allocation6 + $0x70] sm:$0xff]
    %v106 = vld [vmem:[#allocation6 + $0x78] sm:$0xff]
    %v123 = vunpack.c.l.b16 %v75
    %v124 = vunpack.c.l.b16 %v76
    %v125 = vunpack.c.l.b16 %v77
    %v126 = vunpack.c.l.b16 %v78
    %v127 = vunpack.c.l.b16 %v79
    %v128 = vunpack.c.l.b16 %v80
    %v129 = vunpack.c.l.b16 %v81
    %v130 = vunpack.c.l.b16 %v82
    %v131 = vunpack.c.l.b16 %v83
    %v132 = vunpack.c.l.b16 %v84
    %v133 = vunpack.c.l.b16 %v85
    %v134 = vunpack.c.l.b16 %v86
    %v135 = vunpack.c.l.b16 %v87
    %v136 = vunpack.c.l.b16 %v88
    %v137 = vunpack.c.l.b16 %v89
    %v138 = vunpack.c.l.b16 %v90
    %v139 = vpack.c.b16 %v124, %v123
    %v140 = vpack.c.b16 %v126, %v125
    %v141 = vpack.c.b16 %v128, %v127
    %v142 = vpack.c.b16 %v130, %v129
    %v143 = vpack.c.b16 %v132, %v131
    %v144 = vpack.c.b16 %v134, %v133
    %v145 = vpack.c.b16 %v136, %v135
    %v146 = vpack.c.b16 %v138, %v137
    %v171 = vunpack.c.l.b16 %v91
    %v172 = vunpack.c.h.b16 %v91
    %v173 = vunpack.c.l.b16 %v92
    %v174 = vunpack.c.h.b16 %v92
    %v175 = vunpack.c.l.b16 %v93
    %v176 = vunpack.c.h.b16 %v93
    %v177 = vunpack.c.l.b16 %v94
    %v178 = vunpack.c.h.b16 %v94
    %v179 = vunpack.c.l.b16 %v95
    %v180 = vunpack.c.h.b16 %v95
    %v181 = vunpack.c.l.b16 %v96
    %v182 = vunpack.c.h.b16 %v96
    %v183 = vunpack.c.l.b16 %v97
    %v184 = vunpack.c.h.b16 %v97
    %v185 = vunpack.c.l.b16 %v98
    %v186 = vunpack.c.h.b16 %v98
    %v187 = vunpack.c.l.b16 %v99
    %v188 = vunpack.c.h.b16 %v99
    %v189 = vunpack.c.l.b16 %v100
    %v190 = vunpack.c.h.b16 %v100
    %v191 = vunpack.c.l.b16 %v101
    %v192 = vunpack.c.h.b16 %v101
    %v193 = vunpack.c.l.b16 %v102
    %v194 = vunpack.c.h.b16 %v102
    %v195 = vunpack.c.l.b16 %v103
    %v196 = vunpack.c.h.b16 %v103
    %v197 = vunpack.c.l.b16 %v104
    %v198 = vunpack.c.h.b16 %v104
    %v199 = vunpack.c.l.b16 %v105
    %v200 = vunpack.c.h.b16 %v105
    %v201 = vunpack.c.l.b16 %v106
    %v202 = vunpack.c.h.b16 %v106
    %v203 = vpack.c.b16 %v173, %v171
    %v204 = vpack.c.b16 %v174, %v172
    %v205 = vpack.c.b16 %v177, %v175
    %v206 = vpack.c.b16 %v178, %v176
    %v207 = vpack.c.b16 %v181, %v179
    %v208 = vpack.c.b16 %v182, %v180
    %v209 = vpack.c.b16 %v185, %v183
    %v210 = vpack.c.b16 %v186, %v184
    %v211 = vpack.c.b16 %v189, %v187
    %v212 = vpack.c.b16 %v190, %v188
    %v213 = vpack.c.b16 %v193, %v191
    %v214 = vpack.c.b16 %v194, %v192
    %v215 = vpack.c.b16 %v197, %v195
    %v216 = vpack.c.b16 %v198, %v196
    %v217 = vpack.c.b16 %v201, %v199
    %v218 = vpack.c.b16 %v202, %v200
    %235 = vmatprep.subr.bf16.mxu0 %v218
    %236 = vmatpush1.bf16.msra.mxu0 %v217
    %237 = vmatprep.subr.bf16.mxu0 %v216
    %238 = vmatpush1.bf16.msra.mxu0 %v215
    %239 = vmatprep.subr.bf16.mxu0 %v214
    %240 = vmatpush1.bf16.msra.mxu0 %v213
    %241 = vmatprep.subr.bf16.mxu0 %v212
    %242 = vmatpush1.bf16.msra.mxu0 %v211
    %243 = vmatprep.subr.bf16.mxu0 %v210
    %244 = vmatpush1.bf16.msra.mxu0 %v209
    %245 = vmatprep.subr.bf16.mxu0 %v208
    %246 = vmatpush1.bf16.msra.mxu0 %v207
    %247 = vmatprep.subr.bf16.mxu0 %v206
    %248 = vmatpush1.bf16.msra.mxu0 %v205
    %249 = vmatprep.subr.bf16.mxu0 %v204
    %250 = vmatpush1.bf16.msra.mxu0 %v203
    %251 = vmatprep.subr.bf16.mxu0 0
    %252 = vmatpush2.bf16.msra.mxu0 0
    %253 = vmatprep.subr.bf16.mxu0 0
    %254 = vmatpush2.bf16.msra.mxu0 0
    %255 = vmatprep.subr.bf16.mxu0 0
    %256 = vmatpush2.bf16.msra.mxu0 0
    %257 = vmatprep.subr.bf16.mxu0 0
    %258 = vmatpush2.bf16.msra.mxu0 0
    %259 = vmatprep.subr.bf16.mxu0 0
    %260 = vmatpush2.bf16.msra.mxu0 0
    %261 = vmatprep.subr.bf16.mxu0 0
    %262 = vmatpush2.bf16.msra.mxu0 0
    %263 = vmatprep.subr.bf16.mxu0 0
    %264 = vmatpush2.bf16.msra.mxu0 0
    %265 = vmatprep.subr.bf16.mxu0 0
    %266 = vmatpush2.bf16.msra.mxu0 0
    %267 = vmatprep.mubr.bf16.mxu0 0
    %268 = vmatmul.mubr.bf16.gmra.mxu0 %v139
    %v269 = vpop.f32.mrf.mxu0
    %v270 = vadd.f32 0.0, %v269
    %v271 = vpop.f32.mrf.mxu0
    %v272 = vadd.f32 0.0, %v271
    %v273 = vpop.f32.mrf.mxu0
    %v274 = vadd.f32 0.0, %v273
    %v275 = vpop.f32.mrf.mxu0
    %v276 = vadd.f32 0.0, %v275
    %277 = vmatprep.mubr.bf16.mxu0 0
    %278 = vmatmul.mubr.bf16.gmra.mxu0 %v140
    %v279 = vpop.f32.mrf.mxu0
    %v280 = vadd.f32 0.0, %v279
    %v281 = vpop.f32.mrf.mxu0
    %v282 = vadd.f32 0.0, %v281
    %v283 = vpop.f32.mrf.mxu0
    %v284 = vadd.f32 0.0, %v283
    %v285 = vpop.f32.mrf.mxu0
    %v286 = vadd.f32 0.0, %v285
    %287 = vmatprep.mubr.bf16.mxu0 0
    %288 = vmatmul.mubr.bf16.gmra.mxu0 %v141
    %v289 = vpop.f32.mrf.mxu0
    %v290 = vadd.f32 0.0, %v289
    %v291 = vpop.f32.mrf.mxu0
    %v292 = vadd.f32 0.0, %v291
    %v293 = vpop.f32.mrf.mxu0
    %v294 = vadd.f32 0.0, %v293
    %v295 = vpop.f32.mrf.mxu0
    %v296 = vadd.f32 0.0, %v295
    %297 = vmatprep.mubr.bf16.mxu0 0
    %298 = vmatmul.mubr.bf16.gmra.mxu0 %v142
    %v299 = vpop.f32.mrf.mxu0
    %v300 = vadd.f32 0.0, %v299
    %v301 = vpop.f32.mrf.mxu0
    %v302 = vadd.f32 0.0, %v301
    %v303 = vpop.f32.mrf.mxu0
    %v304 = vadd.f32 0.0, %v303
    %v305 = vpop.f32.mrf.mxu0
    %v306 = vadd.f32 0.0, %v305
    %307 = vmatprep.mubr.bf16.mxu0 0
    %308 = vmatmul.mubr.bf16.gmra.mxu0 %v143
    %v309 = vpop.f32.mrf.mxu0
    %v310 = vadd.f32 0.0, %v309
    %v311 = vpop.f32.mrf.mxu0
    %v312 = vadd.f32 0.0, %v311
    %v313 = vpop.f32.mrf.mxu0
    %v314 = vadd.f32 0.0, %v313
    %v315 = vpop.f32.mrf.mxu0
    %v316 = vadd.f32 0.0, %v315
    %317 = vmatprep.mubr.bf16.mxu0 0
    %318 = vmatmul.mubr.bf16.gmra.mxu0 %v144
    %v319 = vpop.f32.mrf.mxu0
    %v320 = vadd.f32 0.0, %v319
    %v321 = vpop.f32.mrf.mxu0
    %v322 = vadd.f32 0.0, %v321
    %v323 = vpop.f32.mrf.mxu0
    %v324 = vadd.f32 0.0, %v323
    %v325 = vpop.f32.mrf.mxu0
    %v326 = vadd.f32 0.0, %v325
    %327 = vmatprep.mubr.bf16.mxu0 0
    %328 = vmatmul.mubr.bf16.gmra.mxu0 %v145
    %v329 = vpop.f32.mrf.mxu0
    %v330 = vadd.f32 0.0, %v329
    %v331 = vpop.f32.mrf.mxu0
    %v332 = vadd.f32 0.0, %v331
    %v333 = vpop.f32.mrf.mxu0
    %v334 = vadd.f32 0.0, %v333
    %v335 = vpop.f32.mrf.mxu0
    %v336 = vadd.f32 0.0, %v335
    %337 = vmatprep.mubr.bf16.mxu0 0
    %338 = vmatmul.mubr.bf16.gmra.mxu0 %v146
    %v339 = vpop.f32.mrf.mxu0
    %v340 = vadd.f32 0.0, %v339
    %v341 = vpop.f32.mrf.mxu0
    %v342 = vadd.f32 0.0, %v341
    %v343 = vpop.f32.mrf.mxu0
    %v344 = vadd.f32 0.0, %v343
    %v345 = vpop.f32.mrf.mxu0
    %v346 = vadd.f32 0.0, %v345
    %347 = vdwg.mxu0
    %v348 = vpack.c.bf16 %v276, %v272
    %v349 = vpack.c.bf16 %v286, %v282
    %v350 = vpack.c.bf16 %v296, %v292
    %v351 = vpack.c.bf16 %v306, %v302
    %v352 = vpack.c.bf16 %v316, %v312
    %v353 = vpack.c.bf16 %v326, %v322
    %v354 = vpack.c.bf16 %v336, %v332
    %v355 = vpack.c.bf16 %v346, %v342
    %v372 = vunpack.c.l.b16 %v59
    %v373 = vunpack.c.l.b16 %v60
    %v374 = vunpack.c.l.b16 %v61
    %v375 = vunpack.c.l.b16 %v62
    %v376 = vunpack.c.l.b16 %v63
    %v377 = vunpack.c.l.b16 %v64
    %v378 = vunpack.c.l.b16 %v65
    %v379 = vunpack.c.l.b16 %v66
    %v380 = vunpack.c.l.b16 %v67
    %v381 = vunpack.c.l.b16 %v68
    %v382 = vunpack.c.l.b16 %v69
    %v383 = vunpack.c.l.b16 %v70
    %v384 = vunpack.c.l.b16 %v71
    %v385 = vunpack.c.l.b16 %v72
    %v386 = vunpack.c.l.b16 %v73
    %v387 = vunpack.c.l.b16 %v74
    %v388 = vpack.c.b16 %v373, %v372
    %v389 = vpack.c.b16 %v375, %v374
    %v390 = vpack.c.b16 %v377, %v376
    %v391 = vpack.c.b16 %v379, %v378
    %v392 = vpack.c.b16 %v381, %v380
    %v393 = vpack.c.b16 %v383, %v382
    %v394 = vpack.c.b16 %v385, %v384
    %v395 = vpack.c.b16 %v387, %v386
    %404 = vmatprep.subr.bf16.mxu0 0
    %405 = vmatpush1.bf16.msra.mxu0 %v355
    %406 = vmatprep.subr.bf16.mxu0 0
    %407 = vmatpush1.bf16.msra.mxu0 %v354
    %408 = vmatprep.subr.bf16.mxu0 0
    %409 = vmatpush1.bf16.msra.mxu0 %v353
    %410 = vmatprep.subr.bf16.mxu0 0
    %411 = vmatpush1.bf16.msra.mxu0 %v352
    %412 = vmatprep.subr.bf16.mxu0 0
    %413 = vmatpush1.bf16.msra.mxu0 %v351
    %414 = vmatprep.subr.bf16.mxu0 0
    %415 = vmatpush1.bf16.msra.mxu0 %v350
    %416 = vmatprep.subr.bf16.mxu0 0
    %417 = vmatpush1.bf16.msra.mxu0 %v349
    %418 = vmatprep.subr.bf16.mxu0 0
    %419 = vmatpush1.bf16.msra.mxu0 %v348
    %420 = vmatprep.subr.bf16.mxu0 0
    %421 = vmatpush2.bf16.msra.mxu0 0
    %422 = vmatprep.subr.bf16.mxu0 0
    %423 = vmatpush2.bf16.msra.mxu0 0
    %424 = vmatprep.subr.bf16.mxu0 0
    %425 = vmatpush2.bf16.msra.mxu0 0
    %426 = vmatprep.subr.bf16.mxu0 0
    %427 = vmatpush2.bf16.msra.mxu0 0
    %428 = vmatprep.subr.bf16.mxu0 0
    %429 = vmatpush2.bf16.msra.mxu0 0
    %430 = vmatprep.subr.bf16.mxu0 0
    %431 = vmatpush2.bf16.msra.mxu0 0
    %432 = vmatprep.subr.bf16.mxu0 0
    %433 = vmatpush2.bf16.msra.mxu0 0
    %434 = vmatprep.subr.bf16.mxu0 0
    %435 = vmatpush2.bf16.msra.mxu0 0
    %436 = vmatprep.mubr.bf16.mxu0 0
    %437 = vmatmul.mubr.bf16.gmra.mxu0 %v388
    %v438 = vpop.f32.mrf.mxu0
    %v439 = vadd.f32 0.0, %v438
    %v440 = vpop.f32.mrf.mxu0
    %v441 = vpop.f32.mrf.mxu0
    %v442 = vadd.f32 0.0, %v441
    %v443 = vpop.f32.mrf.mxu0
    %444 = vmatprep.mubr.bf16.mxu0 0
    %445 = vmatmul.mubr.bf16.gmra.mxu0 %v389
    %v446 = vpop.f32.mrf.mxu0
    %v447 = vadd.f32 0.0, %v446
    %v448 = vpop.f32.mrf.mxu0
    %v449 = vpop.f32.mrf.mxu0
    %v450 = vadd.f32 0.0, %v449
    %v451 = vpop.f32.mrf.mxu0
    %452 = vmatprep.mubr.bf16.mxu0 0
    %453 = vmatmul.mubr.bf16.gmra.mxu0 %v390
    %v454 = vpop.f32.mrf.mxu0
    %v455 = vadd.f32 0.0, %v454
    %v456 = vpop.f32.mrf.mxu0
    %v457 = vpop.f32.mrf.mxu0
    %v458 = vadd.f32 0.0, %v457
    %v459 = vpop.f32.mrf.mxu0
    %460 = vmatprep.mubr.bf16.mxu0 0
    %461 = vmatmul.mubr.bf16.gmra.mxu0 %v391
    %v462 = vpop.f32.mrf.mxu0
    %v463 = vadd.f32 0.0, %v462
    %v464 = vpop.f32.mrf.mxu0
    %v465 = vpop.f32.mrf.mxu0
    %v466 = vadd.f32 0.0, %v465
    %v467 = vpop.f32.mrf.mxu0
    %468 = vmatprep.mubr.bf16.mxu0 0
    %469 = vmatmul.mubr.bf16.gmra.mxu0 %v392
    %v470 = vpop.f32.mrf.mxu0
    %v471 = vadd.f32 0.0, %v470
    %v472 = vpop.f32.mrf.mxu0
    %v473 = vpop.f32.mrf.mxu0
    %v474 = vadd.f32 0.0, %v473
    %v475 = vpop.f32.mrf.mxu0
    %476 = vmatprep.mubr.bf16.mxu0 0
    %477 = vmatmul.mubr.bf16.gmra.mxu0 %v393
    %v478 = vpop.f32.mrf.mxu0
    %v479 = vadd.f32 0.0, %v478
    %v480 = vpop.f32.mrf.mxu0
    %v481 = vpop.f32.mrf.mxu0
    %v482 = vadd.f32 0.0, %v481
    %v483 = vpop.f32.mrf.mxu0
    %484 = vmatprep.mubr.bf16.mxu0 0
    %485 = vmatmul.mubr.bf16.gmra.mxu0 %v394
    %v486 = vpop.f32.mrf.mxu0
    %v487 = vadd.f32 0.0, %v486
    %v488 = vpop.f32.mrf.mxu0
    %v489 = vpop.f32.mrf.mxu0
    %v490 = vadd.f32 0.0, %v489
    %v491 = vpop.f32.mrf.mxu0
    %492 = vmatprep.mubr.bf16.mxu0 0
    %493 = vmatmul.mubr.bf16.gmra.mxu0 %v395
    %v494 = vpop.f32.mrf.mxu0
    %v495 = vadd.f32 0.0, %v494
    %v496 = vpop.f32.mrf.mxu0
    %v497 = vpop.f32.mrf.mxu0
    %v498 = vadd.f32 0.0, %v497
    %v499 = vpop.f32.mrf.mxu0
    %500 = vdwg.mxu0
    %v501 = vadd.f32 %v270, %v439
    %v502 = vadd.f32 %v274, %v442
    %v503 = vadd.f32 %v280, %v447
    %v504 = vadd.f32 %v284, %v450
    %v505 = vadd.f32 %v290, %v455
    %v506 = vadd.f32 %v294, %v458
    %v507 = vadd.f32 %v300, %v463
    %v508 = vadd.f32 %v304, %v466
    %v509 = vadd.f32 %v310, %v471
    %v510 = vadd.f32 %v314, %v474
    %v511 = vadd.f32 %v320, %v479
    %v512 = vadd.f32 %v324, %v482
    %v513 = vadd.f32 %v330, %v487
    %v514 = vadd.f32 %v334, %v490
    %v515 = vadd.f32 %v340, %v495
    %v516 = vadd.f32 %v344, %v498
    %v517 = vld [vmem:[%s3] sm:$0x1]
    %v519 = vlaneseq
    %v520 = vshrl.u32 %v519, 7
    %v521 = vsub.s32 0, %v520
    %v522 = vrot.slane %v517, %v521
    %v524 = vadd.f32 %v501, %v522
    %v525 = vadd.f32 %v502, %v522
    %v526 = vadd.f32 %v503, %v522
    %v527 = vadd.f32 %v504, %v522
    %v528 = vadd.f32 %v505, %v522
    %v529 = vadd.f32 %v506, %v522
    %v530 = vadd.f32 %v507, %v522
    %v531 = vadd.f32 %v508, %v522
    %v532 = vadd.f32 %v509, %v522
    %v533 = vadd.f32 %v510, %v522
    %v534 = vadd.f32 %v511, %v522
    %v535 = vadd.f32 %v512, %v522
    %v536 = vadd.f32 %v513, %v522
    %v537 = vadd.f32 %v514, %v522
    %v538 = vadd.f32 %v515, %v522
    %v539 = vadd.f32 %v516, %v522
    %v540 = vmax.f32 %v524, 0.0
    %v541 = vmax.f32 %v525, 0.0
    %v542 = vmax.f32 %v526, 0.0
    %v543 = vmax.f32 %v527, 0.0
    %v544 = vmax.f32 %v528, 0.0
    %v545 = vmax.f32 %v529, 0.0
    %v546 = vmax.f32 %v530, 0.0
    %v547 = vmax.f32 %v531, 0.0
    %v548 = vmax.f32 %v532, 0.0
    %v549 = vmax.f32 %v533, 0.0
    %v550 = vmax.f32 %v534, 0.0
    %v551 = vmax.f32 %v535, 0.0
    %v552 = vmax.f32 %v536, 0.0
    %v553 = vmax.f32 %v537, 0.0
    %v554 = vmax.f32 %v538, 0.0
    %v555 = vmax.f32 %v539, 0.0
    %v556 = vpack.c.bf16 %v541, %v540
    %v557 = vpack.c.bf16 %v543, %v542
    %v558 = vpack.c.bf16 %v545, %v544
    %v559 = vpack.c.bf16 %v547, %v546
    %v560 = vpack.c.bf16 %v549, %v548
    %v561 = vpack.c.bf16 %v551, %v550
    %v562 = vpack.c.bf16 %v553, %v552
    %v563 = vpack.c.bf16 %v555, %v554
    %s564 = scalar_lea.vmem [#allocation6], 128
    %v565 = vld [vmem:[%s564] sm:$0xff]
    %v566 = vld [vmem:[%s564 + $0x8] sm:$0xff]
    %v567 = vld [vmem:[%s564 + $0x10] sm:$0xff]
    %v568 = vld [vmem:[%s564 + $0x18] sm:$0xff]
    %v569 = vld [vmem:[%s564 + $0x20] sm:$0xff]
    %v570 = vld [vmem:[%s564 + $0x28] sm:$0xff]
    %v571 = vld [vmem:[%s564 + $0x30] sm:$0xff]
    %v572 = vld [vmem:[%s564 + $0x38] sm:$0xff]
    %v573 = vld [vmem:[%s564 + $0x40] sm:$0xff]
    %v574 = vld [vmem:[%s564 + $0x48] sm:$0xff]
    %v575 = vld [vmem:[%s564 + $0x50] sm:$0xff]
    %v576 = vld [vmem:[%s564 + $0x58] sm:$0xff]
    %v577 = vld [vmem:[%s564 + $0x60] sm:$0xff]
    %v578 = vld [vmem:[%s564 + $0x68] sm:$0xff]
    %v579 = vld [vmem:[%s564 + $0x70] sm:$0xff]
    %v580 = vld [vmem:[%s564 + $0x78] sm:$0xff]
    %v597 = vunpack.c.l.b16 %v565
    %v598 = vunpack.c.h.b16 %v565
    %v599 = vunpack.c.l.b16 %v566
    %v600 = vunpack.c.h.b16 %v566
    %v601 = vunpack.c.l.b16 %v567
    %v602 = vunpack.c.h.b16 %v567
    %v603 = vunpack.c.l.b16 %v568
    %v604 = vunpack.c.h.b16 %v568
    %v605 = vunpack.c.l.b16 %v569
    %v606 = vunpack.c.h.b16 %v569
    %v607 = vunpack.c.l.b16 %v570
    %v608 = vunpack.c.h.b16 %v570
    %v609 = vunpack.c.l.b16 %v571
    %v610 = vunpack.c.h.b16 %v571
    %v611 = vunpack.c.l.b16 %v572
    %v612 = vunpack.c.h.b16 %v572
    %v613 = vunpack.c.l.b16 %v573
    %v614 = vunpack.c.h.b16 %v573
    %v615 = vunpack.c.l.b16 %v574
    %v616 = vunpack.c.h.b16 %v574
    %v617 = vunpack.c.l.b16 %v575
    %v618 = vunpack.c.h.b16 %v575
    %v619 = vunpack.c.l.b16 %v576
    %v620 = vunpack.c.h.b16 %v576
    %v621 = vunpack.c.l.b16 %v577
    %v622 = vunpack.c.h.b16 %v577
    %v623 = vunpack.c.l.b16 %v578
    %v624 = vunpack.c.h.b16 %v578
    %v625 = vunpack.c.l.b16 %v579
    %v626 = vunpack.c.h.b16 %v579
    %v627 = vunpack.c.l.b16 %v580
    %v628 = vunpack.c.h.b16 %v580
    %v629 = vpack.c.b16 %v599, %v597
    %v630 = vpack.c.b16 %v600, %v598
    %v631 = vpack.c.b16 %v603, %v601
    %v632 = vpack.c.b16 %v604, %v602
    %v633 = vpack.c.b16 %v607, %v605
    %v634 = vpack.c.b16 %v608, %v606
    %v635 = vpack.c.b16 %v611, %v609
    %v636 = vpack.c.b16 %v612, %v610
    %v637 = vpack.c.b16 %v615, %v613
    %v638 = vpack.c.b16 %v616, %v614
    %v639 = vpack.c.b16 %v619, %v617
    %v640 = vpack.c.b16 %v620, %v618
    %v641 = vpack.c.b16 %v623, %v621
    %v642 = vpack.c.b16 %v624, %v622
    %v643 = vpack.c.b16 %v627, %v625
    %v644 = vpack.c.b16 %v628, %v626
    %661 = vmatprep.subr.bf16.mxu0 %v644
    %662 = vmatpush1.bf16.msra.mxu0 %v643
    %663 = vmatprep.subr.bf16.mxu0 %v642
    %664 = vmatpush1.bf16.msra.mxu0 %v641
    %665 = vmatprep.subr.bf16.mxu0 %v640
    %666 = vmatpush1.bf16.msra.mxu0 %v639
    %667 = vmatprep.subr.bf16.mxu0 %v638
    %668 = vmatpush1.bf16.msra.mxu0 %v637
    %669 = vmatprep.subr.bf16.mxu0 %v636
    %670 = vmatpush1.bf16.msra.mxu0 %v635
    %671 = vmatprep.subr.bf16.mxu0 %v634
    %672 = vmatpush1.bf16.msra.mxu0 %v633
    %673 = vmatprep.subr.bf16.mxu0 %v632
    %674 = vmatpush1.bf16.msra.mxu0 %v631
    %675 = vmatprep.subr.bf16.mxu0 %v630
    %676 = vmatpush1.bf16.msra.mxu0 %v629
    %677 = vmatprep.subr.bf16.mxu0 0
    %678 = vmatpush2.bf16.msra.mxu0 0
    %679 = vmatprep.subr.bf16.mxu0 0
    %680 = vmatpush2.bf16.msra.mxu0 0
    %681 = vmatprep.subr.bf16.mxu0 0
    %682 = vmatpush2.bf16.msra.mxu0 0
    %683 = vmatprep.subr.bf16.mxu0 0
    %684 = vmatpush2.bf16.msra.mxu0 0
    %685 = vmatprep.subr.bf16.mxu0 0
    %686 = vmatpush2.bf16.msra.mxu0 0
    %687 = vmatprep.subr.bf16.mxu0 0
    %688 = vmatpush2.bf16.msra.mxu0 0
    %689 = vmatprep.subr.bf16.mxu0 0
    %690 = vmatpush2.bf16.msra.mxu0 0
    %691 = vmatprep.subr.bf16.mxu0 0
    %692 = vmatpush2.bf16.msra.mxu0 0
    %693 = vmatprep.mubr.bf16.mxu0 0
    %694 = vmatmul.mubr.bf16.gmra.mxu0 %v556
    %v695 = vpop.f32.mrf.mxu0
    %v696 = vadd.f32 0.0, %v695
    %v697 = vpop.f32.mrf.mxu0
    %v698 = vadd.f32 0.0, %v697
    %v699 = vpop.f32.mrf.mxu0
    %v700 = vadd.f32 0.0, %v699
    %v701 = vpop.f32.mrf.mxu0
    %v702 = vadd.f32 0.0, %v701
    %703 = vmatprep.mubr.bf16.mxu0 0
    %704 = vmatmul.mubr.bf16.gmra.mxu0 %v557
    %v705 = vpop.f32.mrf.mxu0
    %v706 = vadd.f32 0.0, %v705
    %v707 = vpop.f32.mrf.mxu0
    %v708 = vadd.f32 0.0, %v707
    %v709 = vpop.f32.mrf.mxu0
    %v710 = vadd.f32 0.0, %v709
    %v711 = vpop.f32.mrf.mxu0
    %v712 = vadd.f32 0.0, %v711
    %713 = vmatprep.mubr.bf16.mxu0 0
    %714 = vmatmul.mubr.bf16.gmra.mxu0 %v558
    %v715 = vpop.f32.mrf.mxu0
    %v716 = vadd.f32 0.0, %v715
    %v717 = vpop.f32.mrf.mxu0
    %v718 = vadd.f32 0.0, %v717
    %v719 = vpop.f32.mrf.mxu0
    %v720 = vadd.f32 0.0, %v719
    %v721 = vpop.f32.mrf.mxu0
    %v722 = vadd.f32 0.0, %v721
    %723 = vmatprep.mubr.bf16.mxu0 0
    %724 = vmatmul.mubr.bf16.gmra.mxu0 %v559
    %v725 = vpop.f32.mrf.mxu0
    %v726 = vadd.f32 0.0, %v725
    %v727 = vpop.f32.mrf.mxu0
    %v728 = vadd.f32 0.0, %v727
    %v729 = vpop.f32.mrf.mxu0
    %v730 = vadd.f32 0.0, %v729
    %v731 = vpop.f32.mrf.mxu0
    %v732 = vadd.f32 0.0, %v731
    %733 = vmatprep.mubr.bf16.mxu0 0
    %734 = vmatmul.mubr.bf16.gmra.mxu0 %v560
    %v735 = vpop.f32.mrf.mxu0
    %v736 = vadd.f32 0.0, %v735
    %v737 = vpop.f32.mrf.mxu0
    %v738 = vadd.f32 0.0, %v737
    %v739 = vpop.f32.mrf.mxu0
    %v740 = vadd.f32 0.0, %v739
    %v741 = vpop.f32.mrf.mxu0
    %v742 = vadd.f32 0.0, %v741
    %743 = vmatprep.mubr.bf16.mxu0 0
    %744 = vmatmul.mubr.bf16.gmra.mxu0 %v561
    %v745 = vpop.f32.mrf.mxu0
    %v746 = vadd.f32 0.0, %v745
    %v747 = vpop.f32.mrf.mxu0
    %v748 = vadd.f32 0.0, %v747
    %v749 = vpop.f32.mrf.mxu0
    %v750 = vadd.f32 0.0, %v749
    %v751 = vpop.f32.mrf.mxu0
    %v752 = vadd.f32 0.0, %v751
    %753 = vmatprep.mubr.bf16.mxu0 0
    %754 = vmatmul.mubr.bf16.gmra.mxu0 %v562
    %v755 = vpop.f32.mrf.mxu0
    %v756 = vadd.f32 0.0, %v755
    %v757 = vpop.f32.mrf.mxu0
    %v758 = vadd.f32 0.0, %v757
    %v759 = vpop.f32.mrf.mxu0
    %v760 = vadd.f32 0.0, %v759
    %v761 = vpop.f32.mrf.mxu0
    %v762 = vadd.f32 0.0, %v761
    %763 = vmatprep.mubr.bf16.mxu0 0
    %764 = vmatmul.mubr.bf16.gmra.mxu0 %v563
    %v765 = vpop.f32.mrf.mxu0
    %v766 = vadd.f32 0.0, %v765
    %v767 = vpop.f32.mrf.mxu0
    %v768 = vadd.f32 0.0, %v767
    %v769 = vpop.f32.mrf.mxu0
    %v770 = vadd.f32 0.0, %v769
    %v771 = vpop.f32.mrf.mxu0
    %v772 = vadd.f32 0.0, %v771
    %773 = vdwg.mxu0
    %v774 = vpack.c.bf16 %v702, %v698
    %v775 = vpack.c.bf16 %v712, %v708
    %v776 = vpack.c.bf16 %v722, %v718
    %v777 = vpack.c.bf16 %v732, %v728
    %v778 = vpack.c.bf16 %v742, %v738
    %v779 = vpack.c.bf16 %v752, %v748
    %v780 = vpack.c.bf16 %v762, %v758
    %v781 = vpack.c.bf16 %v772, %v768
    %782 = vmatprep.subr.bf16.mxu0 0
    %783 = vmatpush1.bf16.msra.mxu0 %v781
    %784 = vmatprep.subr.bf16.mxu0 0
    %785 = vmatpush1.bf16.msra.mxu0 %v780
    %786 = vmatprep.subr.bf16.mxu0 0
    %787 = vmatpush1.bf16.msra.mxu0 %v779
    %788 = vmatprep.subr.bf16.mxu0 0
    %789 = vmatpush1.bf16.msra.mxu0 %v778
    %790 = vmatprep.subr.bf16.mxu0 0
    %791 = vmatpush1.bf16.msra.mxu0 %v777
    %792 = vmatprep.subr.bf16.mxu0 0
    %793 = vmatpush1.bf16.msra.mxu0 %v776
    %794 = vmatprep.subr.bf16.mxu0 0
    %795 = vmatpush1.bf16.msra.mxu0 %v775
    %796 = vmatprep.subr.bf16.mxu0 0
    %797 = vmatpush1.bf16.msra.mxu0 %v774
    %798 = vmatprep.subr.bf16.mxu0 0
    %799 = vmatpush2.bf16.msra.mxu0 0
    %800 = vmatprep.subr.bf16.mxu0 0
    %801 = vmatpush2.bf16.msra.mxu0 0
    %802 = vmatprep.subr.bf16.mxu0 0
    %803 = vmatpush2.bf16.msra.mxu0 0
    %804 = vmatprep.subr.bf16.mxu0 0
    %805 = vmatpush2.bf16.msra.mxu0 0
    %806 = vmatprep.subr.bf16.mxu0 0
    %807 = vmatpush2.bf16.msra.mxu0 0
    %808 = vmatprep.subr.bf16.mxu0 0
    %809 = vmatpush2.bf16.msra.mxu0 0
    %810 = vmatprep.subr.bf16.mxu0 0
    %811 = vmatpush2.bf16.msra.mxu0 0
    %812 = vmatprep.subr.bf16.mxu0 0
    %813 = vmatpush2.bf16.msra.mxu0 0
    %814 = vmatprep.mubr.bf16.mxu0 0
    %815 = vmatmul.mubr.bf16.gmra.mxu0 %v388
    %v816 = vpop.f32.mrf.mxu0
    %v817 = vadd.f32 0.0, %v816
    %v818 = vpop.f32.mrf.mxu0
    %v819 = vpop.f32.mrf.mxu0
    %v820 = vadd.f32 0.0, %v819
    %v821 = vpop.f32.mrf.mxu0
    %822 = vmatprep.mubr.bf16.mxu0 0
    %823 = vmatmul.mubr.bf16.gmra.mxu0 %v389
    %v824 = vpop.f32.mrf.mxu0
    %v825 = vadd.f32 0.0, %v824
    %v826 = vpop.f32.mrf.mxu0
    %v827 = vpop.f32.mrf.mxu0
    %v828 = vadd.f32 0.0, %v827
    %v829 = vpop.f32.mrf.mxu0
    %830 = vmatprep.mubr.bf16.mxu0 0
    %831 = vmatmul.mubr.bf16.gmra.mxu0 %v390
    %v832 = vpop.f32.mrf.mxu0
    %v833 = vadd.f32 0.0, %v832
    %v834 = vpop.f32.mrf.mxu0
    %v835 = vpop.f32.mrf.mxu0
    %v836 = vadd.f32 0.0, %v835
    %v837 = vpop.f32.mrf.mxu0
    %838 = vmatprep.mubr.bf16.mxu0 0
    %839 = vmatmul.mubr.bf16.gmra.mxu0 %v391
    %v840 = vpop.f32.mrf.mxu0
    %v841 = vadd.f32 0.0, %v840
    %v842 = vpop.f32.mrf.mxu0
    %v843 = vpop.f32.mrf.mxu0
    %v844 = vadd.f32 0.0, %v843
    %v845 = vpop.f32.mrf.mxu0
    %846 = vmatprep.mubr.bf16.mxu0 0
    %847 = vmatmul.mubr.bf16.gmra.mxu0 %v392
    %v848 = vpop.f32.mrf.mxu0
    %v849 = vadd.f32 0.0, %v848
    %v850 = vpop.f32.mrf.mxu0
    %v851 = vpop.f32.mrf.mxu0
    %v852 = vadd.f32 0.0, %v851
    %v853 = vpop.f32.mrf.mxu0
    %854 = vmatprep.mubr.bf16.mxu0 0
    %855 = vmatmul.mubr.bf16.gmra.mxu0 %v393
    %v856 = vpop.f32.mrf.mxu0
    %v857 = vadd.f32 0.0, %v856
    %v858 = vpop.f32.mrf.mxu0
    %v859 = vpop.f32.mrf.mxu0
    %v860 = vadd.f32 0.0, %v859
    %v861 = vpop.f32.mrf.mxu0
    %862 = vmatprep.mubr.bf16.mxu0 0
    %863 = vmatmul.mubr.bf16.gmra.mxu0 %v394
    %v864 = vpop.f32.mrf.mxu0
    %v865 = vadd.f32 0.0, %v864
    %v866 = vpop.f32.mrf.mxu0
    %v867 = vpop.f32.mrf.mxu0
    %v868 = vadd.f32 0.0, %v867
    %v869 = vpop.f32.mrf.mxu0
    %870 = vmatprep.mubr.bf16.mxu0 0
    %871 = vmatmul.mubr.bf16.gmra.mxu0 %v395
    %v872 = vpop.f32.mrf.mxu0
    %v873 = vadd.f32 0.0, %v872
    %v874 = vpop.f32.mrf.mxu0
    %v875 = vpop.f32.mrf.mxu0
    %v876 = vadd.f32 0.0, %v875
    %v877 = vpop.f32.mrf.mxu0
    %878 = vdwg.mxu0
    %v879 = vadd.f32 %v696, %v817
    %v880 = vadd.f32 %v700, %v820
    %v881 = vadd.f32 %v706, %v825
    %v882 = vadd.f32 %v710, %v828
    %v883 = vadd.f32 %v716, %v833
    %v884 = vadd.f32 %v720, %v836
    %v885 = vadd.f32 %v726, %v841
    %v886 = vadd.f32 %v730, %v844
    %v887 = vadd.f32 %v736, %v849
    %v888 = vadd.f32 %v740, %v852
    %v889 = vadd.f32 %v746, %v857
    %v890 = vadd.f32 %v750, %v860
    %v891 = vadd.f32 %v756, %v865
    %v892 = vadd.f32 %v760, %v868
    %v893 = vadd.f32 %v766, %v873
    %v894 = vadd.f32 %v770, %v876
    %s895 = scalar_lea.vmem %s3, 1
    %v896 = vld [vmem:[%s895] sm:$0x1]
    %v898 = vlaneseq
    %v899 = vshrl.u32 %v898, 7
    %v900 = vsub.s32 0, %v899
    %v901 = vrot.slane %v896, %v900
    %v903 = vadd.f32 %v879, %v901
    %v904 = vadd.f32 %v880, %v901
    %v905 = vadd.f32 %v881, %v901
    %v906 = vadd.f32 %v882, %v901
    %v907 = vadd.f32 %v883, %v901
    %v908 = vadd.f32 %v884, %v901
    %v909 = vadd.f32 %v885, %v901
    %v910 = vadd.f32 %v886, %v901
    %v911 = vadd.f32 %v887, %v901
    %v912 = vadd.f32 %v888, %v901
    %v913 = vadd.f32 %v889, %v901
    %v914 = vadd.f32 %v890, %v901
    %v915 = vadd.f32 %v891, %v901
    %v916 = vadd.f32 %v892, %v901
    %v917 = vadd.f32 %v893, %v901
    %v918 = vadd.f32 %v894, %v901
    %v919 = vmax.f32 %v903, 0.0
    %v920 = vmax.f32 %v904, 0.0
    %v921 = vmax.f32 %v905, 0.0
    %v922 = vmax.f32 %v906, 0.0
    %v923 = vmax.f32 %v907, 0.0
    %v924 = vmax.f32 %v908, 0.0
    %v925 = vmax.f32 %v909, 0.0
    %v926 = vmax.f32 %v910, 0.0
    %v927 = vmax.f32 %v911, 0.0
    %v928 = vmax.f32 %v912, 0.0
    %v929 = vmax.f32 %v913, 0.0
    %v930 = vmax.f32 %v914, 0.0
    %v931 = vmax.f32 %v915, 0.0
    %v932 = vmax.f32 %v916, 0.0
    %v933 = vmax.f32 %v917, 0.0
    %v934 = vmax.f32 %v918, 0.0
    %v935 = vpack.c.bf16 %v920, %v919
    %v936 = vpack.c.bf16 %v922, %v921
    %v937 = vpack.c.bf16 %v924, %v923
    %v938 = vpack.c.bf16 %v926, %v925
    %v939 = vpack.c.bf16 %v928, %v927
    %v940 = vpack.c.bf16 %v930, %v929
    %v941 = vpack.c.bf16 %v932, %v931
    %v942 = vpack.c.bf16 %v934, %v933
    %s943 = scalar_lea.vmem [#allocation6], 256
    %v944 = vld [vmem:[%s943] sm:$0xff]
    %v945 = vld [vmem:[%s943 + $0x8] sm:$0xff]
    %v946 = vld [vmem:[%s943 + $0x10] sm:$0xff]
    %v947 = vld [vmem:[%s943 + $0x18] sm:$0xff]
    %v948 = vld [vmem:[%s943 + $0x20] sm:$0xff]
    %v949 = vld [vmem:[%s943 + $0x28] sm:$0xff]
    %v950 = vld [vmem:[%s943 + $0x30] sm:$0xff]
    %v951 = vld [vmem:[%s943 + $0x38] sm:$0xff]
    %v952 = vld [vmem:[%s943 + $0x40] sm:$0xff]
    %v953 = vld [vmem:[%s943 + $0x48] sm:$0xff]
    %v954 = vld [vmem:[%s943 + $0x50] sm:$0xff]
    %v955 = vld [vmem:[%s943 + $0x58] sm:$0xff]
    %v956 = vld [vmem:[%s943 + $0x60] sm:$0xff]
    %v957 = vld [vmem:[%s943 + $0x68] sm:$0xff]
    %v958 = vld [vmem:[%s943 + $0x70] sm:$0xff]
    %v959 = vld [vmem:[%s943 + $0x78] sm:$0xff]
    %v976 = vunpack.c.l.b16 %v944
    %v977 = vunpack.c.h.b16 %v944
    %v978 = vunpack.c.l.b16 %v945
    %v979 = vunpack.c.h.b16 %v945
    %v980 = vunpack.c.l.b16 %v946
    %v981 = vunpack.c.h.b16 %v946
    %v982 = vunpack.c.l.b16 %v947
    %v983 = vunpack.c.h.b16 %v947
    %v984 = vunpack.c.l.b16 %v948
    %v985 = vunpack.c.h.b16 %v948
    %v986 = vunpack.c.l.b16 %v949
    %v987 = vunpack.c.h.b16 %v949
    %v988 = vunpack.c.l.b16 %v950
    %v989 = vunpack.c.h.b16 %v950
    %v990 = vunpack.c.l.b16 %v951
    %v991 = vunpack.c.h.b16 %v951
    %v992 = vunpack.c.l.b16 %v952
    %v993 = vunpack.c.h.b16 %v952
    %v994 = vunpack.c.l.b16 %v953
    %v995 = vunpack.c.h.b16 %v953
    %v996 = vunpack.c.l.b16 %v954
    %v997 = vunpack.c.h.b16 %v954
    %v998 = vunpack.c.l.b16 %v955
    %v999 = vunpack.c.h.b16 %v955
    %v1000 = vunpack.c.l.b16 %v956
    %v1001 = vunpack.c.h.b16 %v956
    %v1002 = vunpack.c.l.b16 %v957
    %v1003 = vunpack.c.h.b16 %v957
    %v1004 = vunpack.c.l.b16 %v958
    %v1005 = vunpack.c.h.b16 %v958
    %v1006 = vunpack.c.l.b16 %v959
    %v1007 = vunpack.c.h.b16 %v959
    %v1008 = vpack.c.b16 %v978, %v976
    %v1009 = vpack.c.b16 %v979, %v977
    %v1010 = vpack.c.b16 %v982, %v980
    %v1011 = vpack.c.b16 %v983, %v981
    %v1012 = vpack.c.b16 %v986, %v984
    %v1013 = vpack.c.b16 %v987, %v985
    %v1014 = vpack.c.b16 %v990, %v988
    %v1015 = vpack.c.b16 %v991, %v989
    %v1016 = vpack.c.b16 %v994, %v992
    %v1017 = vpack.c.b16 %v995, %v993
    %v1018 = vpack.c.b16 %v998, %v996
    %v1019 = vpack.c.b16 %v999, %v997
    %v1020 = vpack.c.b16 %v1002, %v1000
    %v1021 = vpack.c.b16 %v1003, %v1001
    %v1022 = vpack.c.b16 %v1006, %v1004
    %v1023 = vpack.c.b16 %v1007, %v1005
    %1040 = vmatprep.subr.bf16.mxu0 %v1023
    %1041 = vmatpush1.bf16.msra.mxu0 %v1022
    %1042 = vmatprep.subr.bf16.mxu0 %v1021
    %1043 = vmatpush1.bf16.msra.mxu0 %v1020
    %1044 = vmatprep.subr.bf16.mxu0 %v1019
    %1045 = vmatpush1.bf16.msra.mxu0 %v1018
    %1046 = vmatprep.subr.bf16.mxu0 %v1017
    %1047 = vmatpush1.bf16.msra.mxu0 %v1016
    %1048 = vmatprep.subr.bf16.mxu0 %v1015
    %1049 = vmatpush1.bf16.msra.mxu0 %v1014
    %1050 = vmatprep.subr.bf16.mxu0 %v1013
    %1051 = vmatpush1.bf16.msra.mxu0 %v1012
    %1052 = vmatprep.subr.bf16.mxu0 %v1011
    %1053 = vmatpush1.bf16.msra.mxu0 %v1010
    %1054 = vmatprep.subr.bf16.mxu0 %v1009
    %1055 = vmatpush1.bf16.msra.mxu0 %v1008
    %1056 = vmatprep.subr.bf16.mxu0 0
    %1057 = vmatpush2.bf16.msra.mxu0 0
    %1058 = vmatprep.subr.bf16.mxu0 0
    %1059 = vmatpush2.bf16.msra.mxu0 0
    %1060 = vmatprep.subr.bf16.mxu0 0
    %1061 = vmatpush2.bf16.msra.mxu0 0
    %1062 = vmatprep.subr.bf16.mxu0 0
    %1063 = vmatpush2.bf16.msra.mxu0 0
    %1064 = vmatprep.subr.bf16.mxu0 0
    %1065 = vmatpush2.bf16.msra.mxu0 0
    %1066 = vmatprep.subr.bf16.mxu0 0
    %1067 = vmatpush2.bf16.msra.mxu0 0
    %1068 = vmatprep.subr.bf16.mxu0 0
    %1069 = vmatpush2.bf16.msra.mxu0 0
    %1070 = vmatprep.subr.bf16.mxu0 0
    %1071 = vmatpush2.bf16.msra.mxu0 0
    %1072 = vmatprep.mubr.bf16.mxu0 0
    %1073 = vmatmul.mubr.bf16.gmra.mxu0 %v935
    %v1074 = vpop.f32.mrf.mxu0
    %v1075 = vadd.f32 0.0, %v1074
    %v1076 = vpop.f32.mrf.mxu0
    %v1077 = vadd.f32 0.0, %v1076
    %v1078 = vpop.f32.mrf.mxu0
    %v1079 = vadd.f32 0.0, %v1078
    %v1080 = vpop.f32.mrf.mxu0
    %v1081 = vadd.f32 0.0, %v1080
    %1082 = vmatprep.mubr.bf16.mxu0 0
    %1083 = vmatmul.mubr.bf16.gmra.mxu0 %v936
    %v1084 = vpop.f32.mrf.mxu0
    %v1085 = vadd.f32 0.0, %v1084
    %v1086 = vpop.f32.mrf.mxu0
    %v1087 = vadd.f32 0.0, %v1086
    %v1088 = vpop.f32.mrf.mxu0
    %v1089 = vadd.f32 0.0, %v1088
    %v1090 = vpop.f32.mrf.mxu0
    %v1091 = vadd.f32 0.0, %v1090
    %1092 = vmatprep.mubr.bf16.mxu0 0
    %1093 = vmatmul.mubr.bf16.gmra.mxu0 %v937
    %v1094 = vpop.f32.mrf.mxu0
    %v1095 = vadd.f32 0.0, %v1094
    %v1096 = vpop.f32.mrf.mxu0
    %v1097 = vadd.f32 0.0, %v1096
    %v1098 = vpop.f32.mrf.mxu0
    %v1099 = vadd.f32 0.0, %v1098
    %v1100 = vpop.f32.mrf.mxu0
    %v1101 = vadd.f32 0.0, %v1100
    %1102 = vmatprep.mubr.bf16.mxu0 0
    %1103 = vmatmul.mubr.bf16.gmra.mxu0 %v938
    %v1104 = vpop.f32.mrf.mxu0
    %v1105 = vadd.f32 0.0, %v1104
    %v1106 = vpop.f32.mrf.mxu0
    %v1107 = vadd.f32 0.0, %v1106
    %v1108 = vpop.f32.mrf.mxu0
    %v1109 = vadd.f32 0.0, %v1108
    %v1110 = vpop.f32.mrf.mxu0
    %v1111 = vadd.f32 0.0, %v1110
    %1112 = vmatprep.mubr.bf16.mxu0 0
    %1113 = vmatmul.mubr.bf16.gmra.mxu0 %v939
    %v1114 = vpop.f32.mrf.mxu0
    %v1115 = vadd.f32 0.0, %v1114
    %v1116 = vpop.f32.mrf.mxu0
    %v1117 = vadd.f32 0.0, %v1116
    %v1118 = vpop.f32.mrf.mxu0
    %v1119 = vadd.f32 0.0, %v1118
    %v1120 = vpop.f32.mrf.mxu0
    %v1121 = vadd.f32 0.0, %v1120
    %1122 = vmatprep.mubr.bf16.mxu0 0
    %1123 = vmatmul.mubr.bf16.gmra.mxu0 %v940
    %v1124 = vpop.f32.mrf.mxu0
    %v1125 = vadd.f32 0.0, %v1124
    %v1126 = vpop.f32.mrf.mxu0
    %v1127 = vadd.f32 0.0, %v1126
    %v1128 = vpop.f32.mrf.mxu0
    %v1129 = vadd.f32 0.0, %v1128
    %v1130 = vpop.f32.mrf.mxu0
    %v1131 = vadd.f32 0.0, %v1130
    %1132 = vmatprep.mubr.bf16.mxu0 0
    %1133 = vmatmul.mubr.bf16.gmra.mxu0 %v941
    %v1134 = vpop.f32.mrf.mxu0
    %v1135 = vadd.f32 0.0, %v1134
    %v1136 = vpop.f32.mrf.mxu0
    %v1137 = vadd.f32 0.0, %v1136
    %v1138 = vpop.f32.mrf.mxu0
    %v1139 = vadd.f32 0.0, %v1138
    %v1140 = vpop.f32.mrf.mxu0
    %v1141 = vadd.f32 0.0, %v1140
    %1142 = vmatprep.mubr.bf16.mxu0 0
    %1143 = vmatmul.mubr.bf16.gmra.mxu0 %v942
    %v1144 = vpop.f32.mrf.mxu0
    %v1145 = vadd.f32 0.0, %v1144
    %v1146 = vpop.f32.mrf.mxu0
    %v1147 = vadd.f32 0.0, %v1146
    %v1148 = vpop.f32.mrf.mxu0
    %v1149 = vadd.f32 0.0, %v1148
    %v1150 = vpop.f32.mrf.mxu0
    %v1151 = vadd.f32 0.0, %v1150
    %1152 = vdwg.mxu0
    %v1153 = vpack.c.bf16 %v1081, %v1077
    %v1154 = vpack.c.bf16 %v1091, %v1087
    %v1155 = vpack.c.bf16 %v1101, %v1097
    %v1156 = vpack.c.bf16 %v1111, %v1107
    %v1157 = vpack.c.bf16 %v1121, %v1117
    %v1158 = vpack.c.bf16 %v1131, %v1127
    %v1159 = vpack.c.bf16 %v1141, %v1137
    %v1160 = vpack.c.bf16 %v1151, %v1147
    %1161 = vmatprep.subr.bf16.mxu0 0
    %1162 = vmatpush1.bf16.msra.mxu0 %v1160
    %1163 = vmatprep.subr.bf16.mxu0 0
    %1164 = vmatpush1.bf16.msra.mxu0 %v1159
    %1165 = vmatprep.subr.bf16.mxu0 0
    %1166 = vmatpush1.bf16.msra.mxu0 %v1158
    %1167 = vmatprep.subr.bf16.mxu0 0
    %1168 = vmatpush1.bf16.msra.mxu0 %v1157
    %1169 = vmatprep.subr.bf16.mxu0 0
    %1170 = vmatpush1.bf16.msra.mxu0 %v1156
    %1171 = vmatprep.subr.bf16.mxu0 0
    %1172 = vmatpush1.bf16.msra.mxu0 %v1155
    %1173 = vmatprep.subr.bf16.mxu0 0
    %1174 = vmatpush1.bf16.msra.mxu0 %v1154
    %1175 = vmatprep.subr.bf16.mxu0 0
    %1176 = vmatpush1.bf16.msra.mxu0 %v1153
    %1177 = vmatprep.subr.bf16.mxu0 0
    %1178 = vmatpush2.bf16.msra.mxu0 0
    %1179 = vmatprep.subr.bf16.mxu0 0
    %1180 = vmatpush2.bf16.msra.mxu0 0
    %1181 = vmatprep.subr.bf16.mxu0 0
    %1182 = vmatpush2.bf16.msra.mxu0 0
    %1183 = vmatprep.subr.bf16.mxu0 0
    %1184 = vmatpush2.bf16.msra.mxu0 0
    %1185 = vmatprep.subr.bf16.mxu0 0
    %1186 = vmatpush2.bf16.msra.mxu0 0
    %1187 = vmatprep.subr.bf16.mxu0 0
    %1188 = vmatpush2.bf16.msra.mxu0 0
    %1189 = vmatprep.subr.bf16.mxu0 0
    %1190 = vmatpush2.bf16.msra.mxu0 0
    %1191 = vmatprep.subr.bf16.mxu0 0
    %1192 = vmatpush2.bf16.msra.mxu0 0
    %1193 = vmatprep.mubr.bf16.mxu0 0
    %1194 = vmatmul.mubr.bf16.gmra.mxu0 %v388
    %v1195 = vpop.f32.mrf.mxu0
    %v1196 = vadd.f32 0.0, %v1195
    %v1197 = vpop.f32.mrf.mxu0
    %v1198 = vpop.f32.mrf.mxu0
    %v1199 = vadd.f32 0.0, %v1198
    %v1200 = vpop.f32.mrf.mxu0
    %1201 = vmatprep.mubr.bf16.mxu0 0
    %1202 = vmatmul.mubr.bf16.gmra.mxu0 %v389
    %v1203 = vpop.f32.mrf.mxu0
    %v1204 = vadd.f32 0.0, %v1203
    %v1205 = vpop.f32.mrf.mxu0
    %v1206 = vpop.f32.mrf.mxu0
    %v1207 = vadd.f32 0.0, %v1206
    %v1208 = vpop.f32.mrf.mxu0
    %1209 = vmatprep.mubr.bf16.mxu0 0
    %1210 = vmatmul.mubr.bf16.gmra.mxu0 %v390
    %v1211 = vpop.f32.mrf.mxu0
    %v1212 = vadd.f32 0.0, %v1211
    %v1213 = vpop.f32.mrf.mxu0
    %v1214 = vpop.f32.mrf.mxu0
    %v1215 = vadd.f32 0.0, %v1214
    %v1216 = vpop.f32.mrf.mxu0
    %1217 = vmatprep.mubr.bf16.mxu0 0
    %1218 = vmatmul.mubr.bf16.gmra.mxu0 %v391
    %v1219 = vpop.f32.mrf.mxu0
    %v1220 = vadd.f32 0.0, %v1219
    %v1221 = vpop.f32.mrf.mxu0
    %v1222 = vpop.f32.mrf.mxu0
    %v1223 = vadd.f32 0.0, %v1222
    %v1224 = vpop.f32.mrf.mxu0
    %1225 = vmatprep.mubr.bf16.mxu0 0
    %1226 = vmatmul.mubr.bf16.gmra.mxu0 %v392
    %v1227 = vpop.f32.mrf.mxu0
    %v1228 = vadd.f32 0.0, %v1227
    %v1229 = vpop.f32.mrf.mxu0
    %v1230 = vpop.f32.mrf.mxu0
    %v1231 = vadd.f32 0.0, %v1230
    %v1232 = vpop.f32.mrf.mxu0
    %1233 = vmatprep.mubr.bf16.mxu0 0
    %1234 = vmatmul.mubr.bf16.gmra.mxu0 %v393
    %v1235 = vpop.f32.mrf.mxu0
    %v1236 = vadd.f32 0.0, %v1235
    %v1237 = vpop.f32.mrf.mxu0
    %v1238 = vpop.f32.mrf.mxu0
    %v1239 = vadd.f32 0.0, %v1238
    %v1240 = vpop.f32.mrf.mxu0
    %1241 = vmatprep.mubr.bf16.mxu0 0
    %1242 = vmatmul.mubr.bf16.gmra.mxu0 %v394
    %v1243 = vpop.f32.mrf.mxu0
    %v1244 = vadd.f32 0.0, %v1243
    %v1245 = vpop.f32.mrf.mxu0
    %v1246 = vpop.f32.mrf.mxu0
    %v1247 = vadd.f32 0.0, %v1246
    %v1248 = vpop.f32.mrf.mxu0
    %1249 = vmatprep.mubr.bf16.mxu0 0
    %1250 = vmatmul.mubr.bf16.gmra.mxu0 %v395
    %v1251 = vpop.f32.mrf.mxu0
    %v1252 = vadd.f32 0.0, %v1251
    %v1253 = vpop.f32.mrf.mxu0
    %v1254 = vpop.f32.mrf.mxu0
    %v1255 = vadd.f32 0.0, %v1254
    %v1256 = vpop.f32.mrf.mxu0
    %1257 = vdwg.mxu0
    %v1258 = vadd.f32 %v1075, %v1196
    %v1259 = vadd.f32 %v1079, %v1199
    %v1260 = vadd.f32 %v1085, %v1204
    %v1261 = vadd.f32 %v1089, %v1207
    %v1262 = vadd.f32 %v1095, %v1212
    %v1263 = vadd.f32 %v1099, %v1215
    %v1264 = vadd.f32 %v1105, %v1220
    %v1265 = vadd.f32 %v1109, %v1223
    %v1266 = vadd.f32 %v1115, %v1228
    %v1267 = vadd.f32 %v1119, %v1231
    %v1268 = vadd.f32 %v1125, %v1236
    %v1269 = vadd.f32 %v1129, %v1239
    %v1270 = vadd.f32 %v1135, %v1244
    %v1271 = vadd.f32 %v1139, %v1247
    %v1272 = vadd.f32 %v1145, %v1252
    %v1273 = vadd.f32 %v1149, %v1255
    %s1274 = scalar_lea.vmem %s3, 2
    %v1275 = vld [vmem:[%s1274] sm:$0x1]
    %v1277 = vlaneseq
    %v1278 = vshrl.u32 %v1277, 7
    %v1279 = vsub.s32 0, %v1278
    %v1280 = vrot.slane %v1275, %v1279
    %v1282 = vadd.f32 %v1258, %v1280
    %v1283 = vadd.f32 %v1259, %v1280
    %v1284 = vadd.f32 %v1260, %v1280
    %v1285 = vadd.f32 %v1261, %v1280
    %v1286 = vadd.f32 %v1262, %v1280
    %v1287 = vadd.f32 %v1263, %v1280
    %v1288 = vadd.f32 %v1264, %v1280
    %v1289 = vadd.f32 %v1265, %v1280
    %v1290 = vadd.f32 %v1266, %v1280
    %v1291 = vadd.f32 %v1267, %v1280
    %v1292 = vadd.f32 %v1268, %v1280
    %v1293 = vadd.f32 %v1269, %v1280
    %v1294 = vadd.f32 %v1270, %v1280
    %v1295 = vadd.f32 %v1271, %v1280
    %v1296 = vadd.f32 %v1272, %v1280
    %v1297 = vadd.f32 %v1273, %v1280
    %1298 = vst [vmem:[%s4] sm:$0xff] %v1282
    %1299 = vst [vmem:[%s4 + $0x8] sm:$0xff] %v1283
    %1300 = vst [vmem:[%s4 + $0x10] sm:$0xff] %v1284
    %1301 = vst [vmem:[%s4 + $0x18] sm:$0xff] %v1285
    %1302 = vst [vmem:[%s4 + $0x20] sm:$0xff] %v1286
    %1303 = vst [vmem:[%s4 + $0x28] sm:$0xff] %v1287
    %1304 = vst [vmem:[%s4 + $0x30] sm:$0xff] %v1288
    %1305 = vst [vmem:[%s4 + $0x38] sm:$0xff] %v1289
    %1306 = vst [vmem:[%s4 + $0x40] sm:$0xff] %v1290
    %1307 = vst [vmem:[%s4 + $0x48] sm:$0xff] %v1291
    %1308 = vst [vmem:[%s4 + $0x50] sm:$0xff] %v1292
    %1309 = vst [vmem:[%s4 + $0x58] sm:$0xff] %v1293
    %1310 = vst [vmem:[%s4 + $0x60] sm:$0xff] %v1294
    %1311 = vst [vmem:[%s4 + $0x68] sm:$0xff] %v1295
    %1312 = vst [vmem:[%s4 + $0x70] sm:$0xff] %v1296
    %1313 = vst [vmem:[%s4 + $0x78] sm:$0xff] %v1297
    // Predicated region
    $region30: #{encoder_forward_padded.1} parent=1 // pred_check
      _
    $region31: #{encoder_forward_padded.1} parent=1 // pred_check_branch
      %1315 = sbr.rel (0) target = $region33
    $region32: #{encoder_forward_padded.1} parent=1 // pred_region
      _
    $region33: #{encoder_forward_padded.1} parent=1 // pred_fallthru
      _
    // Predicated region
    $region34: #{encoder_forward_padded.1} parent=1 // pred_check
      _
    $region35: #{encoder_forward_padded.1} parent=1 // pred_check_branch
      %1317 = sbr.rel (0) target = $region37
    $region36: #{encoder_forward_padded.1} parent=1 // pred_region
      _
    $region37: #{encoder_forward_padded.1} parent=1 // pred_fallthru
      _
    %1318 = vsyncpa [#allocation3], 1
    %1319 = vsyncpa [#allocation5], 1

</llo_original>
